<compile_context>
chip_gen: v7x
topology: tpu7x:2x2x1
jax: 0.10.0
libtpu: 0.0.40
codegen_flags: <defaults>
</compile_context>

<pallas_src>
import jax
import jax.numpy as jnp
from jax.experimental import pallas as pl
from jax.experimental.pallas import tpu as pltpu


def _round_up(x, m):
    return ((x + m - 1) // m) * m


# ---------------------------------------------------------------------------
# Fused head kernel (per TM-row tile):
#   h   = ReLU(x_bf16 @ W1_bf16 + b1)          (f32 accumulation)
#   out = h_bf16 @ Wc_h_bf16 + pos_contrib     (pos branch + bc pre-folded)
# ---------------------------------------------------------------------------
def _fused_head_kernel(x_ref,      # (TM, E)   bf16  gathered target-token rows
                       posc_ref,   # (TM, Fp)  f32   precomputed pos_table@Wc_p + bc rows
                       w1_ref,     # (E, H)    bf16  resident in VMEM
                       b1_ref,     # (1, H)    f32   resident
                       wch_ref,    # (H, Fp)   bf16  resident
                       o_ref):     # (TM, Fp)  f32
    h = jnp.dot(x_ref[...], w1_ref[...], preferred_element_type=jnp.float32)
    h = jnp.maximum(h + b1_ref[...], 0.0)                       # (TM, H) f32
    # TODO(synk): Dropout is a training-only no-op at eval time.
    acc = jnp.dot(h.astype(jnp.bfloat16), wch_ref[...],
                  preferred_element_type=jnp.float32)            # (TM, Fp) f32
    o_ref[...] = (acc + posc_ref[...]).astype(o_ref.dtype)


# ---------------------------------------------------------------------------
# Forward pass wrapper
# ---------------------------------------------------------------------------
def seq_supervised_forward(params, bert_seq_output, pos_ids, inds, *, tm=256):
    """
    bert_seq_output: [B, S, E] float32 -- stand-in for BertModel hidden states
    pos_ids:         [B, S-2] int32    -- POS tag ids per (trimmed) token
    inds:            [B] int32         -- target-token index per sample (into trimmed seq)
    tm:              row-tile size (256 for v6e/v7x, 128 is enough on v5e)
    returns:         [B, num_frames] float32 classifier logits
    """
    B, S, E = bert_seq_output.shape
    H = params["w1"].shape[1]
    F = params["wc"].shape[1]
    f_pad = _round_up(F, 128)                       # lane-dense classifier output

    # ---- gather-first: select the target token row; +1 folds the seq[:, 1:-1, :] trim ----
    tok_sel = (inds + 1).astype(jnp.int32)
    x_rows = jnp.take_along_axis(bert_seq_output, tok_sel[:, None, None], axis=1)[:, 0, :]
    x_rows = x_rows.astype(jnp.bfloat16)            # (B, E): half the gather DMA bytes

    # ---- fold the POS branch: pos_contrib_table = pos_table @ Wc[H:] + bc (tiny one-time GEMM) ----
    wc_h = params["wc"][:H, :]
    wc_p = params["wc"][H:, :]
    pos_contrib = jnp.dot(params["pos_table"], wc_p,
                          preferred_element_type=jnp.float32) + params["bc"][None, :]
    if f_pad != F:
        pos_contrib = jnp.pad(pos_contrib, ((0, 0), (0, f_pad - F)))
        wc_h = jnp.pad(wc_h, ((0, 0), (0, f_pad - F)))
    pos_sel = jnp.take_along_axis(pos_ids, inds[:, None], axis=1)[:, 0]
    posc_rows = jnp.take(pos_contrib, pos_sel, axis=0)            # (B, f_pad) f32

    # ---- pre-cast/pre-split constant weights once (no per-step casts/slices in-kernel) ----
    w1_bf = params["w1"].astype(jnp.bfloat16)                     # (E, H)
    wch_bf = wc_h.astype(jnp.bfloat16)                            # (H, f_pad)
    b1 = params["b1"].reshape(1, H).astype(jnp.float32)           # (1, H)

    # ---- row tiling: batch the per-sample GEMVs into TM-row GEMMs ----
    tm_eff = min(tm, _round_up(B, 8))
    if B > 8 and _round_up(B, 8) <= tm:
        # batch fits in one tile: split into >=2 so both v7x TensorCores get work
        tm_eff = max(8, _round_up(-(-B // 2), 8))
    b_pad = _round_up(B, tm_eff)
    if b_pad != B:
        x_rows = jnp.pad(x_rows, ((0, b_pad - B), (0, 0)))
        posc_rows = jnp.pad(posc_rows, ((0, b_pad - B), (0, 0)))
    grid = (b_pad // tm_eff,)

    grid_spec = pltpu.PrefetchScalarGridSpec(
        num_scalar_prefetch=0,
        grid=grid,
        in_specs=[
            # per-tile activations
            pl.BlockSpec((tm_eff, E), lambda i: (i, 0)),
            pl.BlockSpec((tm_eff, f_pad), lambda i: (i, 0)),
            # constant weights/bias: same block every step -> resident in VMEM
            pl.BlockSpec((E, H), lambda i: (0, 0)),
            pl.BlockSpec((1, H), lambda i: (0, 0)),
            pl.BlockSpec((H, f_pad), lambda i: (0, 0)),
        ],
        out_specs=pl.BlockSpec((tm_eff, f_pad), lambda i: (i, 0)),
    )

    logits_padded = pl.pallas_call(
        _fused_head_kernel,
        out_shape=jax.ShapeDtypeStruct((b_pad, f_pad), jnp.float32),
        grid_spec=grid_spec,
        compiler_params=pltpu.CompilerParams(dimension_semantics=("parallel",)),
    )(x_rows, posc_rows, w1_bf, b1, wch_bf)

    # De-pad batch rows / frame columns. (In production, store classifier params pre-padded
    # and let downstream consume padded logits to skip this copy.)
    return logits_padded[:B, :F]


# ---------------------------------------------------------------------------
# Deterministic parameter init + example run
# ---------------------------------------------------------------------------
def init_params(key, embed_dim, hidden_size, pos_vocab, pos_dim, num_frames):
    ks = jax.random.split(key, 5)
    scale1 = 1.0 / jnp.sqrt(embed_dim)
    scale2 = 1.0 / jnp.sqrt(hidden_size + pos_dim)
    return {
        # learner.linear: nn.Linear(embed_dim, hidden_size), stored [in, out]
        "w1": jax.random.uniform(ks[0], (embed_dim, hidden_size),
                                 jnp.float32, -scale1, scale1),
        "b1": jax.random.uniform(ks[1], (hidden_size,), jnp.float32, -scale1, scale1),
        # pos_embedding: nn.Embedding(POSDICT.size(), pos_dim)
        "pos_table": jax.random.normal(ks[2], (pos_vocab, pos_dim), jnp.float32),
        # classifier: nn.Linear(hidden_size + pos_dim, num_frames), stored [in, out]
        "wc": jax.random.uniform(ks[3], (hidden_size + pos_dim, num_frames),
                                 jnp.float32, -scale2, scale2),
        "bc": jax.random.uniform(ks[4], (num_frames,), jnp.float32, -scale2, scale2),
    }


if __name__ == "__main__":
    # small, module-consistent shapes
    B = 2            # batch
    S = 8            # wordpiece sequence length (incl. [CLS] / final token)
    E = 32           # embed_dim (BERT hidden)
    H = 32           # hidden_size
    P = 8            # pos_dim
    POS_VOCAB = 20   # POSDICT.size()
    NUM_FRAMES = 16  # num_outputs['ner']

    key = jax.random.PRNGKey(0)
    k_params, k_seq, k_pos, k_ind = jax.random.split(key, 4)

    params = init_params(k_params, E, H, POS_VOCAB, P, NUM_FRAMES)

    # synthetic BERT hidden-state output (stand-in for the pretrained encoder)
    bert_seq_output = jax.random.normal(k_seq, (B, S, E), jnp.float32)
    pos_ids = jax.random.randint(k_pos, (B, S - 2), 0, POS_VOCAB, dtype=jnp.int32)
    inds = jax.random.randint(k_ind, (B,), 0, S - 2, dtype=jnp.int32)

    fwd = jax.jit(seq_supervised_forward)
    logits = fwd(params, bert_seq_output, pos_ids, inds)
    jax.block_until_ready(logits)

    # pure-JAX f32 reference of the original head
    tok = jnp.take_along_axis(bert_seq_output, (inds + 1)[:, None, None], axis=1)[:, 0, :]
    h_ref = jnp.maximum(tok @ params["w1"] + params["b1"], 0.0)
    pos_ref = params["pos_table"][jnp.take_along_axis(pos_ids, inds[:, None], axis=1)[:, 0]]
    ref = jnp.concatenate([h_ref, pos_ref], axis=1) @ params["wc"] + params["bc"]

    assert logits.shape == (B, NUM_FRAMES)
    assert logits.dtype == jnp.float32
    assert jnp.allclose(logits, ref, rtol=5e-2, atol=5e-2), "mismatch vs f32 reference"
    print("KERNEL_OK")
</pallas_src>

<mosaic_0001>
module attributes {stable_mosaic.version = 11 : i64} {
  func.func @_fused_head_kernel(%arg0: i32, %arg1: memref<8x32xbf16, #tpu.memory_space<vmem>>, %arg2: memref<8x128xf32, #tpu.memory_space<vmem>>, %arg3: memref<32x32xbf16, #tpu.memory_space<vmem>>, %arg4: memref<1x32xf32, #tpu.memory_space<vmem>>, %arg5: memref<32x128xbf16, #tpu.memory_space<vmem>>, %arg6: memref<8x128xf32, #tpu.memory_space<vmem>>) attributes {dimension_semantics = [#tpu.dimension_semantics<parallel>], iteration_bounds = array<i64: 1>, scalar_prefetch = 0 : i64, scratch_operands = 0 : i64, tpu.core_type = #tpu.core_type<tc>, window_params = [{transform_indices = @transform_0, window_bounds = array<i64: 8, 32>}, {transform_indices = @transform_1, window_bounds = array<i64: 8, 128>}, {pipeline_mode = #tpu.pipeline_mode<synchronous>, transform_indices = @transform_2, window_bounds = array<i64: 32, 32>}, {pipeline_mode = #tpu.pipeline_mode<synchronous>, transform_indices = @transform_3, window_bounds = array<i64: 1, 32>}, {pipeline_mode = #tpu.pipeline_mode<synchronous>, transform_indices = @transform_4, window_bounds = array<i64: 32, 128>}, {transform_indices = @transform_5, window_bounds = array<i64: 8, 128>}]} {
    %c0 = arith.constant 0 : index
    %c0_0 = arith.constant 0 : index
    %0 = vector.load %arg1[%c0, %c0_0] : memref<8x32xbf16, #tpu.memory_space<vmem>>, vector<8x32xbf16>
    %c0_1 = arith.constant 0 : index
    %c0_2 = arith.constant 0 : index
    %1 = vector.load %arg3[%c0_1, %c0_2] : memref<32x32xbf16, #tpu.memory_space<vmem>>, vector<32x32xbf16>
    %cst = arith.constant dense<0.000000e+00> : vector<8x32xf32>
    %2 = tpu.matmul %0, %1, %cst {dimension_numbers = #tpu.dot_dimension_numbers<[1], [0], [0], [1], [0, 0, 1, 1], [], []>} : vector<8x32xbf16>, vector<32x32xbf16>, vector<8x32xf32> -> vector<8x32xf32>
    %c0_3 = arith.constant 0 : index
    %c0_4 = arith.constant 0 : index
    %3 = vector.load %arg4[%c0_3, %c0_4] : memref<1x32xf32, #tpu.memory_space<vmem>>, vector<1x32xf32>
    %4 = vector.broadcast %3 : vector<1x32xf32> to vector<8x32xf32>
    %5 = arith.addf %2, %4 : vector<8x32xf32>
    %cst_5 = arith.constant 0.000000e+00 : f32
    %6 = vector.broadcast %cst_5 : f32 to vector<8x32xf32>
    %7 = arith.maximumf %5, %6 : vector<8x32xf32>
    %8 = arith.truncf %7 : vector<8x32xf32> to vector<8x32xbf16>
    %c0_6 = arith.constant 0 : index
    %c0_7 = arith.constant 0 : index
    %9 = vector.load %arg5[%c0_6, %c0_7] : memref<32x128xbf16, #tpu.memory_space<vmem>>, vector<32x128xbf16>
    %cst_8 = arith.constant dense<0.000000e+00> : vector<8x128xf32>
    %10 = tpu.matmul %8, %9, %cst_8 {dimension_numbers = #tpu.dot_dimension_numbers<[1], [0], [0], [1], [0, 0, 1, 1], [], []>} : vector<8x32xbf16>, vector<32x128xbf16>, vector<8x128xf32> -> vector<8x128xf32>
    %c0_9 = arith.constant 0 : index
    %c0_10 = arith.constant 0 : index
    %11 = vector.load %arg2[%c0_9, %c0_10] : memref<8x128xf32, #tpu.memory_space<vmem>>, vector<8x128xf32>
    %12 = arith.addf %10, %11 : vector<8x128xf32>
    %c0_11 = arith.constant 0 : index
    %c0_12 = arith.constant 0 : index
    %13 = vector.load %arg6[%c0_11, %c0_12] : memref<8x128xf32, #tpu.memory_space<vmem>>, vector<8x128xf32>
    tpu.vector_store %arg6[%c0_11, %c0_12], %12 {strides = array<i32>} : memref<8x128xf32, #tpu.memory_space<vmem>>, vector<8x128xf32>,
    return
  }
  func.func @transform_0(%arg0: i32) -> (i32, i32) {
    %c0_i32 = arith.constant 0 : i32
    %c0_i32_0 = arith.constant 0 : i32
    return %arg0, %c0_i32 : i32, i32
  }
  func.func @transform_1(%arg0: i32) -> (i32, i32) {
    %c0_i32 = arith.constant 0 : i32
    %c0_i32_0 = arith.constant 0 : i32
    return %arg0, %c0_i32 : i32, i32
  }
  func.func @transform_2(%arg0: i32) -> (i32, i32) {
    %c0_i32 = arith.constant 0 : i32
    %c0_i32_0 = arith.constant 0 : i32
    %c0_i32_1 = arith.constant 0 : i32
    return %c0_i32, %c0_i32_0 : i32, i32
  }
  func.func @transform_3(%arg0: i32) -> (i32, i32) {
    %c0_i32 = arith.constant 0 : i32
    %c0_i32_0 = arith.constant 0 : i32
    %c0_i32_1 = arith.constant 0 : i32
    return %c0_i32, %c0_i32_0 : i32, i32
  }
  func.func @transform_4(%arg0: i32) -> (i32, i32) {
    %c0_i32 = arith.constant 0 : i32
    %c0_i32_0 = arith.constant 0 : i32
    %c0_i32_1 = arith.constant 0 : i32
    return %c0_i32, %c0_i32_0 : i32, i32
  }
  func.func @transform_5(%arg0: i32) -> (i32, i32) {
    %c0_i32 = arith.constant 0 : i32
    %c0_i32_0 = arith.constant 0 : i32
    return %arg0, %c0_i32 : i32, i32
  }
}

</mosaic_0001>

<llo_original>
// kernel: seq_supervised_forward.1
$region0: #{seq_supervised_forward.1}
  #allocation0 [shape = 'u32[]', space=smem, size = 0x4, offset = 0x4, fixed_abs, tag = 'smem constant byte address 0x4 - core index']
  #allocation1 [shape = 'u32[144,128]{1,0:T(1,128)}', space=vmem, size = 0x12000, scoped, tag = 'internal scratch']
  %s0 = inlined_call_operand.vmem [shape: bf16[8,32], index: 0, kind: input, shape index: {}]
  %s1 = inlined_call_operand.vmem [shape: f32[8,128], index: 1, kind: input, shape index: {}]
  %s2 = inlined_call_operand.vmem [shape: bf16[32,32], index: 2, kind: input, shape index: {}]
  %s3 = inlined_call_operand.vmem [shape: f32[1,32], index: 3, kind: input, shape index: {}]
  %s4 = inlined_call_operand.vmem [shape: bf16[32,128], index: 4, kind: input, shape index: {}]
  %s5 = inlined_call_operand.vmem [shape: f32[8,128], index: 5, kind: output, shape index: {}]
  %s6 = sld [smem:[#allocation0]]
  $region30: #{seq_supervised_forward.1} parent=0
    _
  %s8 = ssub.s32 1, %s6
  %s9 = scalar_select 0, %s8, %s6
  // Predicated region
  $region2: #{seq_supervised_forward.1} parent=0 // pred_check
    _
  $region3: #{seq_supervised_forward.1} parent=0 // pred_check_branch
    %11 = sbr.rel (0) target = $region5
  $region4: #{seq_supervised_forward.1} parent=0 // pred_region
    _
  $region5: #{seq_supervised_forward.1} parent=0 // pred_fallthru
    _
  // Predicated region
  $region6: #{seq_supervised_forward.1} parent=0 // pred_check
    _
  $region7: #{seq_supervised_forward.1} parent=0 // pred_check_branch
    %13 = sbr.rel (0) target = $region9
  $region8: #{seq_supervised_forward.1} parent=0 // pred_region
    _
  $region9: #{seq_supervised_forward.1} parent=0 // pred_fallthru
    _
  // Predicated region
  $region10: #{seq_supervised_forward.1} parent=0 // pred_check
    _
  $region11: #{seq_supervised_forward.1} parent=0 // pred_check_branch
    %15 = sbr.rel (0) target = $region13
  $region12: #{seq_supervised_forward.1} parent=0 // pred_region
    _
  $region13: #{seq_supervised_forward.1} parent=0 // pred_fallthru
    _
  // Predicated region
  $region14: #{seq_supervised_forward.1} parent=0 // pred_check
    _
  $region15: #{seq_supervised_forward.1} parent=0 // pred_check_branch
    %17 = sbr.rel (0) target = $region17
  $region16: #{seq_supervised_forward.1} parent=0 // pred_region
    _
  $region17: #{seq_supervised_forward.1} parent=0 // pred_fallthru
    _
  // Predicated region
  $region18: #{seq_supervised_forward.1} parent=0 // pred_check
    _
  $region19: #{seq_supervised_forward.1} parent=0 // pred_check_branch
    %19 = sbr.rel (0) target = $region21
  $region20: #{seq_supervised_forward.1} parent=0 // pred_region
    _
  $region21: #{seq_supervised_forward.1} parent=0 // pred_fallthru
    _
  %v21 = vld [vmem:[%s0] sm:$0xf]
  %v22 = vld [vmem:[%s2] sm:$0xf]
  %v23 = vld [vmem:[%s2 + $0x4] sm:$0xf]
  %v24 = vld [vmem:[%s2 + $0x8] sm:$0xf]
  %v25 = vld [vmem:[%s2 + $0xc] sm:$0xf]
  %v26 = vld [vmem:[%s3] sm:$0x1]
  %v28 = vlaneseq
  %v29 = vshrl.u32 %v28, 7
  %v30 = vsub.s32 0, %v29
  %v31 = vrot.slane %v26, %v30
  %v37 = vunpack.c.l.b16 %v22
  %v38 = vunpack.c.l.b16 %v23
  %v39 = vunpack.c.l.b16 %v24
  %v40 = vunpack.c.l.b16 %v25
  %v41 = vpack.c.b16 %v38, %v37
  %v42 = vpack.c.b16 %v40, %v39
  %vm45 = vcmask 261120
  %v47 = vsel %vm45, %v21, 0
  %49 = vmatprep.subr.bf16.mxu0 0
  %50 = vmatpush1.bf16.msra.mxu0 %v41
  %51 = vmatprep.subr.bf16.mxu0 0
  %52 = vmatpush1.bf16.msra.mxu0 %v42
  %53 = vmatprep.subr.bf16.mxu0 0
  %54 = vmatpush1.bf16.msra.mxu0 0
  %55 = vmatprep.subr.bf16.mxu0 0
  %56 = vmatpush1.bf16.msra.mxu0 0
  %57 = vmatprep.subr.bf16.mxu0 0
  %58 = vmatpush1.bf16.msra.mxu0 0
  %59 = vmatprep.subr.bf16.mxu0 0
  %60 = vmatpush1.bf16.msra.mxu0 0
  %61 = vmatprep.subr.bf16.mxu0 0
  %62 = vmatpush1.bf16.msra.mxu0 0
  %63 = vmatprep.subr.bf16.mxu0 0
  %64 = vmatpush1.bf16.msra.mxu0 0
  %65 = vmatprep.subr.bf16.mxu0 0
  %66 = vmatpush1.bf16.msra.mxu0 0
  %67 = vmatprep.subr.bf16.mxu0 0
  %68 = vmatpush1.bf16.msra.mxu0 0
  %69 = vmatprep.subr.bf16.mxu0 0
  %70 = vmatpush1.bf16.msra.mxu0 0
  %71 = vmatprep.subr.bf16.mxu0 0
  %72 = vmatpush1.bf16.msra.mxu0 0
  %73 = vmatprep.subr.bf16.mxu0 0
  %74 = vmatpush1.bf16.msra.mxu0 0
  %75 = vmatprep.subr.bf16.mxu0 0
  %76 = vmatpush1.bf16.msra.mxu0 0
  %77 = vmatprep.subr.bf16.mxu0 0
  %78 = vmatpush1.bf16.msra.mxu0 0
  %79 = vmatprep.subr.bf16.mxu0 0
  %80 = vmatpush1.bf16.msra.mxu0 0
  %81 = vmatprep.mubr.bf16.mxu0 0
  %82 = vmatmul.mubr.bf16.gmra.mrb[0].mxu0 %v47
  %v83 = vpop.f32.mrb[0].mxu0
  %v84 = vadd.f32 %v31, %v83
  %v85 = vpop.f32.mrb[0].mxu0
  %v86 = vpop.f32.mrb[0].mxu0
  %v87 = vpop.f32.mrb[0].mxu0
  %88 = vdwg.mxu0
  %v89 = vmax.f32 %v84, 0.0
  %v90 = vpack.c.bf16 %v89, %v89
  %v91 = vld [vmem:[%s4] sm:$0xf]
  %v92 = vld [vmem:[%s4 + $0x4] sm:$0xf]
  %v93 = vld [vmem:[%s4 + $0x8] sm:$0xf]
  %v94 = vld [vmem:[%s4 + $0xc] sm:$0xf]
  %v95 = vld [vmem:[%s1] sm:$0xff]
  %v100 = vunpack.c.l.b16 %v91
  %v101 = vunpack.c.l.b16 %v92
  %v102 = vunpack.c.l.b16 %v93
  %v103 = vunpack.c.l.b16 %v94
  %v104 = vpack.c.b16 %v101, %v100
  %v105 = vpack.c.b16 %v103, %v102
  %v109 = vsel %vm45, %v90, 0
  %111 = vmatprep.subr.bf16.mxu0 0
  %112 = vmatpush1.bf16.msra.mxu0 %v104
  %113 = vmatprep.subr.bf16.mxu0 0
  %114 = vmatpush1.bf16.msra.mxu0 %v105
  %115 = vmatprep.subr.bf16.mxu0 0
  %116 = vmatpush1.bf16.msra.mxu0 0
  %117 = vmatprep.subr.bf16.mxu0 0
  %118 = vmatpush1.bf16.msra.mxu0 0
  %119 = vmatprep.subr.bf16.mxu0 0
  %120 = vmatpush1.bf16.msra.mxu0 0
  %121 = vmatprep.subr.bf16.mxu0 0
  %122 = vmatpush1.bf16.msra.mxu0 0
  %123 = vmatprep.subr.bf16.mxu0 0
  %124 = vmatpush1.bf16.msra.mxu0 0
  %125 = vmatprep.subr.bf16.mxu0 0
  %126 = vmatpush1.bf16.msra.mxu0 0
  %127 = vmatprep.subr.bf16.mxu0 0
  %128 = vmatpush1.bf16.msra.mxu0 0
  %129 = vmatprep.subr.bf16.mxu0 0
  %130 = vmatpush1.bf16.msra.mxu0 0
  %131 = vmatprep.subr.bf16.mxu0 0
  %132 = vmatpush1.bf16.msra.mxu0 0
  %133 = vmatprep.subr.bf16.mxu0 0
  %134 = vmatpush1.bf16.msra.mxu0 0
  %135 = vmatprep.subr.bf16.mxu0 0
  %136 = vmatpush1.bf16.msra.mxu0 0
  %137 = vmatprep.subr.bf16.mxu0 0
  %138 = vmatpush1.bf16.msra.mxu0 0
  %139 = vmatprep.subr.bf16.mxu0 0
  %140 = vmatpush1.bf16.msra.mxu0 0
  %141 = vmatprep.subr.bf16.mxu0 0
  %142 = vmatpush1.bf16.msra.mxu0 0
  %143 = vmatprep.mubr.bf16.mxu0 0
  %144 = vmatmul.mubr.bf16.gmra.mrb[0].mxu0 %v109
  %v145 = vpop.f32.mrb[0].mxu0
  %v146 = vadd.f32 %v95, %v145
  %v147 = vpop.f32.mrb[0].mxu0
  %v148 = vpop.f32.mrb[0].mxu0
  %v149 = vpop.f32.mrb[0].mxu0
  %150 = vdwg.mxu0
  %151 = vst [vmem:[%s5] sm:$0xff] %v146
  // Predicated region
  $region22: #{seq_supervised_forward.1} parent=0 // pred_check
    _
  $region23: #{seq_supervised_forward.1} parent=0 // pred_check_branch
    %153 = sbr.rel (0) target = $region25
  $region24: #{seq_supervised_forward.1} parent=0 // pred_region
    _
  $region25: #{seq_supervised_forward.1} parent=0 // pred_fallthru
    _
  // Predicated region
  $region26: #{seq_supervised_forward.1} parent=0 // pred_check
    _
  $region27: #{seq_supervised_forward.1} parent=0 // pred_check_branch
    %155 = sbr.rel (0) target = $region29
  $region28: #{seq_supervised_forward.1} parent=0 // pred_region
    _
  $region29: #{seq_supervised_forward.1} parent=0 // pred_fallthru
    _

</llo_original>
